<compile_context>
chip_gen: v6e
topology: v6e:2x2x1
jax: 0.10.0
libtpu: 0.0.40
codegen_flags: <defaults>
</compile_context>

<pallas_src>
import functools

import jax
import jax.numpy as jnp
from jax import lax
from jax.experimental import pallas as pl
from jax.experimental.pallas import tpu as pltpu


# --------------------------------------------------------------------------- #
# Fused kernel: im2col -> single MXU matmul -> folded BN/bias -> ReLU
# --------------------------------------------------------------------------- #
def _basic_conv_kernel(xp_ref, w_ref, scale_ref, shift_ref, o_ref, col_ref, *,
                       cin, k, wp, dil, n_ext, relu):
    """One batch element per grid step.

    xp_ref   : (1, Cin, Hp*Wp + (K-1)*dil) flat zero-padded image (lane-dense)
    w_ref    : (Cout, K*K*Cin)             conv weight, (ki, kj, ci)-minor order
    scale_ref: (Cout, 1)                   folded BN(+bias) scale
    shift_ref: (Cout, 1)                   folded BN(+bias) shift
    o_ref    : (1, Cout, Hout*Wp)          lane-dense "extended" output
    col_ref  : VMEM scratch (K*K*Cin, Hout*Wp)  im2col patch matrix
    """
    # im2col: for every conv tap (ki, kj), the needed samples of the flattened
    # padded image form a single CONTIGUOUS window of length Hout*Wp starting
    # at (ki*Wp + kj)*dil.  The extra (Wp - Wout) wrap-around columns per
    # output row are garbage and get stripped in the wrapper; this keeps every
    # copy contiguous and lane-dense (no strided/relayout slices per tap).
    for ki in range(k):
        for kj in range(k):
            tap = ki * k + kj
            off = (ki * wp + kj) * dil
            col_ref[tap * cin:(tap + 1) * cin, :] = xp_ref[0, :, off:off + n_ext]

    # The whole KxK conv is one MXU matmul with f32 accumulation.
    y = jnp.dot(w_ref[...], col_ref[...], preferred_element_type=jnp.float32)
    y = y * scale_ref[...] + shift_ref[...]       # folded BN (+ conv bias)
    if relu:
        y = jnp.maximum(y, 0.0)
    o_ref[0] = y.astype(o_ref.dtype)


# --------------------------------------------------------------------------- #
# Wrapper: BasicConv.forward  (NCHW in, NCHW out)
# --------------------------------------------------------------------------- #
def basic_conv(x, params, *, kernel_size, stride=1, padding=0, dilation=1,
               groups=1, relu=True, bn=True, bias=False, eps=1e-5):
    if stride != 1:
        # TODO(synk): strided conv not implemented in the Pallas path.
        raise NotImplementedError("stride > 1 not supported")
    if groups != 1:
        # TODO(synk): grouped conv not implemented in the Pallas path.
        raise NotImplementedError("groups > 1 not supported")

    B, Cin, H, W = x.shape
    K, p, d = kernel_size, padding, dilation
    Cout = params["w"].shape[0]
    Hp, Wp = H + 2 * p, W + 2 * p
    Hout, Wout = Hp - d * (K - 1), Wp - d * (K - 1)
    assert Hout > 0 and Wout > 0
    n_ext = Hout * Wp            # per-row over-wide ("extended") output length
    tail = (K - 1) * d           # the last tap's window overruns by this much

    # Fold conv bias + inference-mode BatchNorm into per-channel scale/shift.
    if bn:
        inv = params["bn_gamma"] / jnp.sqrt(params["bn_var"] + eps)
        scale = inv
        shift = params["bn_beta"] - params["bn_mean"] * inv
        if bias:
            shift = shift + params["b"] * inv
    else:
        scale = jnp.ones((Cout,), jnp.float32)
        shift = params["b"] if bias else jnp.zeros((Cout,), jnp.float32)
    scale = scale.reshape(Cout, 1).astype(jnp.float32)
    shift = shift.reshape(Cout, 1).astype(jnp.float32)

    # Weight (Cout, Cin, K, K) -> (Cout, K*K*Cin), minor order (ki, kj, ci)
    # to match the tap-major im2col rows built inside the kernel.
    w2d = params["w"].transpose(0, 2, 3, 1).reshape(Cout, K * K * Cin)

    # Zero-pad + flatten the image (wrapper-side layout plumbing); the kernel
    # then only touches contiguous, lane-dense slabs.
    xp = jnp.pad(x, ((0, 0), (0, 0), (p, p), (p, p))).reshape(B, Cin, Hp * Wp)
    if tail:
        xp = jnp.pad(xp, ((0, 0), (0, 0), (0, tail)))
    l_pad = Hp * Wp + tail

    kern = functools.partial(_basic_conv_kernel, cin=Cin, k=K, wp=Wp, dil=d,
                             n_ext=n_ext, relu=relu)
    out_ext = pl.pallas_call(
        kern,
        out_shape=jax.ShapeDtypeStruct((B, Cout, n_ext), x.dtype),
        grid=(B,),
        in_specs=[
            pl.BlockSpec((1, Cin, l_pad), lambda b: (b, 0, 0)),
            pl.BlockSpec((Cout, K * K * Cin), lambda b: (0, 0)),
            pl.BlockSpec((Cout, 1), lambda b: (0, 0)),
            pl.BlockSpec((Cout, 1), lambda b: (0, 0)),
        ],
        out_specs=pl.BlockSpec((1, Cout, n_ext), lambda b: (b, 0, 0)),
        scratch_shapes=[pltpu.VMEM((K * K * Cin, n_ext), x.dtype)],
        compiler_params=pltpu.CompilerParams(
            dimension_semantics=("parallel",)),
    )(xp, w2d, scale, shift)

    # Strip the Wp-Wout wrap columns (free reshape + tiny XLA slice) -> NCHW.
    return out_ext.reshape(B, Cout, Hout, Wp)[:, :, :, :Wout]


# --------------------------------------------------------------------------- #
# Pure-JAX reference (for the correctness check)
# --------------------------------------------------------------------------- #
def basic_conv_reference(x, params, *, kernel_size, stride=1, padding=0,
                         dilation=1, groups=1, relu=True, bn=True, bias=False,
                         eps=1e-5):
    del kernel_size
    y = lax.conv_general_dilated(
        x, params["w"], window_strides=(stride, stride),
        padding=((padding, padding), (padding, padding)),
        rhs_dilation=(dilation, dilation), feature_group_count=groups,
        dimension_numbers=("NCHW", "OIHW", "NCHW"),
        precision=lax.Precision.HIGHEST)
    if bias:
        y = y + params["b"].reshape(1, -1, 1, 1)
    if bn:
        inv = params["bn_gamma"] / jnp.sqrt(params["bn_var"] + eps)
        y = (y - params["bn_mean"].reshape(1, -1, 1, 1)) * inv.reshape(1, -1, 1, 1) \
            + params["bn_beta"].reshape(1, -1, 1, 1)
    if relu:
        y = jnp.maximum(y, 0.0)
    return y


if __name__ == "__main__":
    key = jax.random.PRNGKey(0)

    # --- config 1: 3x3 conv, SAME padding, BN + ReLU (BasicConv defaults) --- #
    B, Cin, Cout, H, W, K = 2, 8, 16, 16, 16, 3
    kx, kw, kg, kb, km, kv, krest = jax.random.split(key, 7)
    x = jax.random.normal(kx, (B, Cin, H, W), jnp.float32)
    params = {
        "w": 0.1 * jax.random.normal(kw, (Cout, Cin, K, K), jnp.float32),
        "bn_gamma": 1.0 + 0.1 * jax.random.normal(kg, (Cout,), jnp.float32),
        "bn_beta": 0.1 * jax.random.normal(kb, (Cout,), jnp.float32),
        "bn_mean": 0.05 * jax.random.normal(km, (Cout,), jnp.float32),
        "bn_var": 1.0 + 0.1 * jax.random.uniform(kv, (Cout,), jnp.float32),
    }
    fwd = jax.jit(functools.partial(basic_conv, kernel_size=K, padding=1))
    out = fwd(x, params)
    jax.block_until_ready(out)
    assert out.shape == (B, Cout, H, W), out.shape

    ref = basic_conv_reference(x, params, kernel_size=K, padding=1)
    # Kernel matmul runs at default MXU precision while the reference uses
    # HIGHEST; at contraction depth K*K*Cin = 72 a few 1e-3 abs error is the
    # expected precision gap, so 1e-2 cleanly separates it from real bugs.
    err = float(jnp.max(jnp.abs(out - ref)))
    assert err < 1e-2, f"max abs error {err}"

    # --- config 2: 1x1 conv, bias, no BN, no ReLU --------------------------- #
    Cout2 = 8
    kw2, kbias = jax.random.split(krest)
    params2 = {
        "w": 0.2 * jax.random.normal(kw2, (Cout2, Cin, 1, 1), jnp.float32),
        "b": 0.1 * jax.random.normal(kbias, (Cout2,), jnp.float32),
    }
    fwd2 = jax.jit(functools.partial(basic_conv, kernel_size=1, padding=0,
                                     relu=False, bn=False, bias=True))
    out2 = fwd2(x, params2)
    jax.block_until_ready(out2)
    assert out2.shape == (B, Cout2, H, W), out2.shape

    ref2 = basic_conv_reference(x, params2, kernel_size=1, relu=False,
                                bn=False, bias=True)
    err2 = float(jnp.max(jnp.abs(out2 - ref2)))
    assert err2 < 1e-2, f"max abs error {err2}"

    print("KERNEL_OK")
</pallas_src>

<mosaic_0001>
module attributes {stable_mosaic.version = 11 : i64} {
  func.func @_basic_conv_kernel(%arg0: i32, %arg1: memref<1x8x326xf32, #tpu.memory_space<vmem>>, %arg2: memref<16x72xf32, #tpu.memory_space<vmem>>, %arg3: memref<16x1xf32, #tpu.memory_space<vmem>>, %arg4: memref<16x1xf32, #tpu.memory_space<vmem>>, %arg5: memref<1x16x288xf32, #tpu.memory_space<vmem>>, %arg6: memref<72x288xf32, #tpu.memory_space<vmem>>) attributes {dimension_semantics = [#tpu.dimension_semantics<parallel>], iteration_bounds = array<i64: 2>, scalar_prefetch = 0 : i64, scratch_operands = 1 : i64, tpu.core_type = #tpu.core_type<tc>, window_params = [{transform_indices = @transform_0, window_bounds = array<i64: 1, 8, 326>}, {pipeline_mode = #tpu.pipeline_mode<synchronous>, transform_indices = @transform_1, window_bounds = array<i64: 16, 72>}, {pipeline_mode = #tpu.pipeline_mode<synchronous>, transform_indices = @transform_2, window_bounds = array<i64: 16, 1>}, {pipeline_mode = #tpu.pipeline_mode<synchronous>, transform_indices = @transform_3, window_bounds = array<i64: 16, 1>}, {transform_indices = @transform_4, window_bounds = array<i64: 1, 16, 288>}]} {
    %c0 = arith.constant 0 : index
    %c0_0 = arith.constant 0 : index
    %c0_1 = arith.constant 0 : index
    %0 = vector.load %arg1[%c0, %c0_0, %c0_1] : memref<1x8x326xf32, #tpu.memory_space<vmem>>, vector<1x8x288xf32>
    %1 = vector.shape_cast %0 : vector<1x8x288xf32> to vector<8x288xf32>
    %c0_2 = arith.constant 0 : index
    %c0_3 = arith.constant 0 : index
    %2 = vector.load %arg6[%c0_2, %c0_3] : memref<72x288xf32, #tpu.memory_space<vmem>>, vector<8x288xf32>
    tpu.vector_store %arg6[%c0_2, %c0_3], %1 {strides = array<i32>} : memref<72x288xf32, #tpu.memory_space<vmem>>, vector<8x288xf32>,
    %c0_4 = arith.constant 0 : index
    %c0_5 = arith.constant 0 : index
    %c1 = arith.constant 1 : index
    %3 = vector.load %arg1[%c0_4, %c0_5, %c1] : memref<1x8x326xf32, #tpu.memory_space<vmem>>, vector<1x8x288xf32>
    %4 = vector.shape_cast %3 : vector<1x8x288xf32> to vector<8x288xf32>
    %c8 = arith.constant 8 : index
    %c0_6 = arith.constant 0 : index
    %5 = vector.load %arg6[%c8, %c0_6] : memref<72x288xf32, #tpu.memory_space<vmem>>, vector<8x288xf32>
    tpu.vector_store %arg6[%c8, %c0_6], %4 {strides = array<i32>} : memref<72x288xf32, #tpu.memory_space<vmem>>, vector<8x288xf32>,
    %c0_7 = arith.constant 0 : index
    %c0_8 = arith.constant 0 : index
    %c2 = arith.constant 2 : index
    %6 = vector.load %arg1[%c0_7, %c0_8, %c2] : memref<1x8x326xf32, #tpu.memory_space<vmem>>, vector<1x8x288xf32>
    %7 = vector.shape_cast %6 : vector<1x8x288xf32> to vector<8x288xf32>
    %c16 = arith.constant 16 : index
    %c0_9 = arith.constant 0 : index
    %8 = vector.load %arg6[%c16, %c0_9] : memref<72x288xf32, #tpu.memory_space<vmem>>, vector<8x288xf32>
    tpu.vector_store %arg6[%c16, %c0_9], %7 {strides = array<i32>} : memref<72x288xf32, #tpu.memory_space<vmem>>, vector<8x288xf32>,
    %c0_10 = arith.constant 0 : index
    %c0_11 = arith.constant 0 : index
    %c18 = arith.constant 18 : index
    %9 = vector.load %arg1[%c0_10, %c0_11, %c18] : memref<1x8x326xf32, #tpu.memory_space<vmem>>, vector<1x8x288xf32>
    %10 = vector.shape_cast %9 : vector<1x8x288xf32> to vector<8x288xf32>
    %c24 = arith.constant 24 : index
    %c0_12 = arith.constant 0 : index
    %11 = vector.load %arg6[%c24, %c0_12] : memref<72x288xf32, #tpu.memory_space<vmem>>, vector<8x288xf32>
    tpu.vector_store %arg6[%c24, %c0_12], %10 {strides = array<i32>} : memref<72x288xf32, #tpu.memory_space<vmem>>, vector<8x288xf32>,
    %c0_13 = arith.constant 0 : index
    %c0_14 = arith.constant 0 : index
    %c19 = arith.constant 19 : index
    %12 = vector.load %arg1[%c0_13, %c0_14, %c19] : memref<1x8x326xf32, #tpu.memory_space<vmem>>, vector<1x8x288xf32>
    %13 = vector.shape_cast %12 : vector<1x8x288xf32> to vector<8x288xf32>
    %c32 = arith.constant 32 : index
    %c0_15 = arith.constant 0 : index
    %14 = vector.load %arg6[%c32, %c0_15] : memref<72x288xf32, #tpu.memory_space<vmem>>, vector<8x288xf32>
    tpu.vector_store %arg6[%c32, %c0_15], %13 {strides = array<i32>} : memref<72x288xf32, #tpu.memory_space<vmem>>, vector<8x288xf32>,
    %c0_16 = arith.constant 0 : index
    %c0_17 = arith.constant 0 : index
    %c20 = arith.constant 20 : index
    %15 = vector.load %arg1[%c0_16, %c0_17, %c20] : memref<1x8x326xf32, #tpu.memory_space<vmem>>, vector<1x8x288xf32>
    %16 = vector.shape_cast %15 : vector<1x8x288xf32> to vector<8x288xf32>
    %c40 = arith.constant 40 : index
    %c0_18 = arith.constant 0 : index
    %17 = vector.load %arg6[%c40, %c0_18] : memref<72x288xf32, #tpu.memory_space<vmem>>, vector<8x288xf32>
    tpu.vector_store %arg6[%c40, %c0_18], %16 {strides = array<i32>} : memref<72x288xf32, #tpu.memory_space<vmem>>, vector<8x288xf32>,
    %c0_19 = arith.constant 0 : index
    %c0_20 = arith.constant 0 : index
    %c36 = arith.constant 36 : index
    %18 = vector.load %arg1[%c0_19, %c0_20, %c36] : memref<1x8x326xf32, #tpu.memory_space<vmem>>, vector<1x8x288xf32>
    %19 = vector.shape_cast %18 : vector<1x8x288xf32> to vector<8x288xf32>
    %c48 = arith.constant 48 : index
    %c0_21 = arith.constant 0 : index
    %20 = vector.load %arg6[%c48, %c0_21] : memref<72x288xf32, #tpu.memory_space<vmem>>, vector<8x288xf32>
    tpu.vector_store %arg6[%c48, %c0_21], %19 {strides = array<i32>} : memref<72x288xf32, #tpu.memory_space<vmem>>, vector<8x288xf32>,
    %c0_22 = arith.constant 0 : index
    %c0_23 = arith.constant 0 : index
    %c37 = arith.constant 37 : index
    %21 = vector.load %arg1[%c0_22, %c0_23, %c37] : memref<1x8x326xf32, #tpu.memory_space<vmem>>, vector<1x8x288xf32>
    %22 = vector.shape_cast %21 : vector<1x8x288xf32> to vector<8x288xf32>
    %c56 = arith.constant 56 : index
    %c0_24 = arith.constant 0 : index
    %23 = vector.load %arg6[%c56, %c0_24] : memref<72x288xf32, #tpu.memory_space<vmem>>, vector<8x288xf32>
    tpu.vector_store %arg6[%c56, %c0_24], %22 {strides = array<i32>} : memref<72x288xf32, #tpu.memory_space<vmem>>, vector<8x288xf32>,
    %c0_25 = arith.constant 0 : index
    %c0_26 = arith.constant 0 : index
    %c38 = arith.constant 38 : index
    %24 = vector.load %arg1[%c0_25, %c0_26, %c38] : memref<1x8x326xf32, #tpu.memory_space<vmem>>, vector<1x8x288xf32>
    %25 = vector.shape_cast %24 : vector<1x8x288xf32> to vector<8x288xf32>
    %c64 = arith.constant 64 : index
    %c0_27 = arith.constant 0 : index
    %26 = vector.load %arg6[%c64, %c0_27] : memref<72x288xf32, #tpu.memory_space<vmem>>, vector<8x288xf32>
    tpu.vector_store %arg6[%c64, %c0_27], %25 {strides = array<i32>} : memref<72x288xf32, #tpu.memory_space<vmem>>, vector<8x288xf32>,
    %c0_28 = arith.constant 0 : index
    %c0_29 = arith.constant 0 : index
    %27 = vector.load %arg2[%c0_28, %c0_29] : memref<16x72xf32, #tpu.memory_space<vmem>>, vector<16x72xf32>
    %c0_30 = arith.constant 0 : index
    %c0_31 = arith.constant 0 : index
    %28 = vector.load %arg6[%c0_30, %c0_31] : memref<72x288xf32, #tpu.memory_space<vmem>>, vector<72x288xf32>
    %cst = arith.constant dense<0.000000e+00> : vector<16x288xf32>
    %29 = tpu.matmul %27, %28, %cst {dimension_numbers = #tpu.dot_dimension_numbers<[1], [0], [0], [1], [0, 0, 1, 1], [], []>} : vector<16x72xf32>, vector<72x288xf32>, vector<16x288xf32> -> vector<16x288xf32>
    %c0_32 = arith.constant 0 : index
    %c0_33 = arith.constant 0 : index
    %30 = vector.load %arg3[%c0_32, %c0_33] : memref<16x1xf32, #tpu.memory_space<vmem>>, vector<16x1xf32>
    %31 = vector.broadcast %30 : vector<16x1xf32> to vector<16x288xf32>
    %32 = arith.mulf %29, %31 : vector<16x288xf32>
    %c0_34 = arith.constant 0 : index
    %c0_35 = arith.constant 0 : index
    %33 = vector.load %arg4[%c0_34, %c0_35] : memref<16x1xf32, #tpu.memory_space<vmem>>, vector<16x1xf32>
    %34 = vector.broadcast %33 : vector<16x1xf32> to vector<16x288xf32>
    %35 = arith.addf %32, %34 : vector<16x288xf32>
    %cst_36 = arith.constant 0.000000e+00 : f32
    %36 = vector.broadcast %cst_36 : f32 to vector<16x288xf32>
    %37 = arith.maximumf %35, %36 : vector<16x288xf32>
    %c0_37 = arith.constant 0 : index
    %c0_38 = arith.constant 0 : index
    %c0_39 = arith.constant 0 : index
    %38 = vector.load %arg5[%c0_37, %c0_38, %c0_39] : memref<1x16x288xf32, #tpu.memory_space<vmem>>, vector<1x16x288xf32>
    %39 = vector.shape_cast %38 : vector<1x16x288xf32> to vector<16x288xf32>
    %40 = vector.shape_cast %37 : vector<16x288xf32> to vector<1x16x288xf32>
    tpu.vector_store %arg5[%c0_37, %c0_38, %c0_39], %40 {strides = array<i32>} : memref<1x16x288xf32, #tpu.memory_space<vmem>>, vector<1x16x288xf32>,
    return
  }
  func.func @transform_0(%arg0: i32) -> (i32, i32, i32) {
    %c0_i32 = arith.constant 0 : i32
    %c0_i32_0 = arith.constant 0 : i32
    %c0_i32_1 = arith.constant 0 : i32
    return %arg0, %c0_i32, %c0_i32_0 : i32, i32, i32
  }
  func.func @transform_1(%arg0: i32) -> (i32, i32) {
    %c0_i32 = arith.constant 0 : i32
    %c0_i32_0 = arith.constant 0 : i32
    %c0_i32_1 = arith.constant 0 : i32
    return %c0_i32, %c0_i32_0 : i32, i32
  }
  func.func @transform_2(%arg0: i32) -> (i32, i32) {
    %c0_i32 = arith.constant 0 : i32
    %c0_i32_0 = arith.constant 0 : i32
    %c0_i32_1 = arith.constant 0 : i32
    return %c0_i32, %c0_i32_0 : i32, i32
  }
  func.func @transform_3(%arg0: i32) -> (i32, i32) {
    %c0_i32 = arith.constant 0 : i32
    %c0_i32_0 = arith.constant 0 : i32
    %c0_i32_1 = arith.constant 0 : i32
    return %c0_i32, %c0_i32_0 : i32, i32
  }
  func.func @transform_4(%arg0: i32) -> (i32, i32, i32) {
    %c0_i32 = arith.constant 0 : i32
    %c0_i32_0 = arith.constant 0 : i32
    %c0_i32_1 = arith.constant 0 : i32
    return %arg0, %c0_i32, %c0_i32_0 : i32, i32, i32
  }
}

</mosaic_0001>

<llo_original>
// kernel: basic_conv.1
$region0: #{basic_conv.1}
  #allocation0 [shape = 'u32[]', space=smem, size = 0x4, offset = 0x4, fixed_abs, tag = 'smem constant byte address 0x4 - core index']
  #allocation1 [shape = 'u32[144,128]{1,0:T(1,128)}', space=vmem, size = 0x12000, scoped, tag = 'internal scratch']
  #allocation2 [shape = 'f32[72,288]{1,0:T(8,128)}', space=vmem, size = 0x1b000, scoped, tag = 'scratch operand']
  %s0 = inlined_call_operand.vmem [shape: f32[2,8,326], index: 0, kind: input, shape index: {}]
  %s1 = inlined_call_operand.vmem [shape: f32[16,72], index: 1, kind: input, shape index: {}]
  %s2 = inlined_call_operand.vmem [shape: f32[16,1], index: 2, kind: input, shape index: {}]
  %s3 = inlined_call_operand.vmem [shape: f32[16,1], index: 3, kind: input, shape index: {}]
  %s4 = inlined_call_operand.vmem [shape: f32[2,16,288], index: 4, kind: output, shape index: {}]
  %s5 = sld [smem:[#allocation0]]
  $region49: #{basic_conv.1} parent=0
    _
  %s7 = ssub.s32 1, %s5
  %s8 = scalar_select 0, %s7, %s5
  loop: start=0, step=1, limit=4
  $region2: #{basic_conv.1} parent=0 // loop_pre_header
    _
  $region3: #{basic_conv.1} parent=0 // loop_header
    %s10 = sphi 0, %s14
    %p11 = scmp.ge.s32.totalorder %s10, 4
    %s20 = sphi 0, %s22
    %s23 = sphi 0, %s20
    %s24 = sphi 0, %s23
    %s40 = sphi 0, %s24
    %s44 = sphi 0, %s44
    %s46 = sphi 0, %s44
    %s47 = sphi 0, %s46
    %s61 = sphi 0, %s47
    %s65 = sphi 0, %s65
    %s67 = sphi 0, %s65
    %s68 = sphi 0, %s67
    %s82 = sphi 0, %s68
    %s86 = sphi 0, %s86
    %s88 = sphi 0, %s86
    %s89 = sphi 0, %s88
    %s103 = sphi 0, %s89
    %s109 = sphi 0, %s111
    %s112 = sphi 0, %s109
    %s113 = sphi 0, %s112
    %s129 = sphi 0, %s113
  $region4: #{basic_conv.1} parent=0 // loop_header_branch
    %13 = sbr.rel (%p11) target = $region8
  $region5: #{basic_conv.1} parent=0 // loop_body
    %s15 = ssub.s32 %s10, 1
    %s16 = ssub.s32 %s10, 2
    %s17 = sadd.s32 %s10, 1
    %s18 = ssub.s32 %s10, %s17
    %p19 = scmp.eq.s32.totalorder %s18, 0
    %s21 = sadd.s32 %s20, 1
    %s22 = scalar_select %p19, %s20, %s21
    %p25 = pneg %p19
    %p26 = scmp.eq.s32.totalorder %s10, 1
    %p27 = por %p25, %p26
    %p28 = scmp.ne.s32.totalorder %s20, %s23
    %p29 = scmp.eq.s32.totalorder %s10, 0
    %p30 = por %p28, %p29
    %p31 = scmp.ne.s32.totalorder %s20, %s23
    %p32 = scmp.eq.s32.totalorder %s15, 1
    %p33 = por %p31, %p32
    %p34 = scmp.ne.s32.totalorder %s23, %s24
    %p35 = scmp.eq.s32.totalorder %s15, 0
    %p36 = por %p34, %p35
    %p37 = scmp.ne.s32.totalorder %s23, %s24
    %p38 = scmp.eq.s32.totalorder %s16, 1
    %p39 = por %p37, %p38
    %p41 = scmp.ne.s32.totalorder %s24, %s40
    %p42 = scmp.eq.s32.totalorder %s16, 0
    %p43 = por %p41, %p42
    %s45 = sadd.s32 %s44, 1
    %p48 = scmp.eq.s32.totalorder %s10, 1
    %p49 = scmp.ne.s32.totalorder %s44, %s46
    %p50 = scmp.eq.s32.totalorder %s10, 0
    %p51 = por %p49, %p50
    %p52 = scmp.ne.s32.totalorder %s44, %s46
    %p53 = scmp.eq.s32.totalorder %s15, 1
    %p54 = por %p52, %p53
    %p55 = scmp.ne.s32.totalorder %s46, %s47
    %p56 = scmp.eq.s32.totalorder %s15, 0
    %p57 = por %p55, %p56
    %p58 = scmp.ne.s32.totalorder %s46, %s47
    %p59 = scmp.eq.s32.totalorder %s16, 1
    %p60 = por %p58, %p59
    %p62 = scmp.ne.s32.totalorder %s47, %s61
    %p63 = scmp.eq.s32.totalorder %s16, 0
    %p64 = por %p62, %p63
    %s66 = sadd.s32 %s65, 1
    %p69 = scmp.eq.s32.totalorder %s10, 1
    %p70 = scmp.ne.s32.totalorder %s65, %s67
    %p71 = scmp.eq.s32.totalorder %s10, 0
    %p72 = por %p70, %p71
    %p73 = scmp.ne.s32.totalorder %s65, %s67
    %p74 = scmp.eq.s32.totalorder %s15, 1
    %p75 = por %p73, %p74
    %p76 = scmp.ne.s32.totalorder %s67, %s68
    %p77 = scmp.eq.s32.totalorder %s15, 0
    %p78 = por %p76, %p77
    %p79 = scmp.ne.s32.totalorder %s67, %s68
    %p80 = scmp.eq.s32.totalorder %s16, 1
    %p81 = por %p79, %p80
    %p83 = scmp.ne.s32.totalorder %s68, %s82
    %p84 = scmp.eq.s32.totalorder %s16, 0
    %p85 = por %p83, %p84
    %s87 = sadd.s32 %s86, 1
    %p90 = scmp.eq.s32.totalorder %s10, 1
    %p91 = scmp.ne.s32.totalorder %s86, %s88
    %p92 = scmp.eq.s32.totalorder %s10, 0
    %p93 = por %p91, %p92
    %p94 = scmp.ne.s32.totalorder %s86, %s88
    %p95 = scmp.eq.s32.totalorder %s15, 1
    %p96 = por %p94, %p95
    %p97 = scmp.ne.s32.totalorder %s88, %s89
    %p98 = scmp.eq.s32.totalorder %s15, 0
    %p99 = por %p97, %p98
    %p100 = scmp.ne.s32.totalorder %s88, %s89
    %p101 = scmp.eq.s32.totalorder %s16, 1
    %p102 = por %p100, %p101
    %p104 = scmp.ne.s32.totalorder %s89, %s103
    %p105 = scmp.eq.s32.totalorder %s16, 0
    %p106 = por %p104, %p105
    %s107 = ssub.s32 %s10, %s17
    %p108 = scmp.eq.s32.totalorder %s107, 0
    %s110 = sadd.s32 %s109, 1
    %s111 = scalar_select %p108, %s109, %s110
    %p114 = pneg %p108
    %p115 = scmp.eq.s32.totalorder %s10, 1
    %p116 = por %p114, %p115
    %p117 = scmp.ne.s32.totalorder %s109, %s112
    %p118 = scmp.eq.s32.totalorder %s10, 0
    %p119 = por %p117, %p118
    %p120 = scmp.ne.s32.totalorder %s109, %s112
    %p121 = scmp.eq.s32.totalorder %s15, 1
    %p122 = por %p120, %p121
    %p123 = scmp.ne.s32.totalorder %s112, %s113
    %p124 = scmp.eq.s32.totalorder %s15, 0
    %p125 = por %p123, %p124
    %p126 = scmp.ne.s32.totalorder %s112, %s113
    %p127 = scmp.eq.s32.totalorder %s16, 1
    %p128 = por %p126, %p127
    %p130 = scmp.ne.s32.totalorder %s113, %s129
    %p131 = scmp.eq.s32.totalorder %s16, 0
    %p132 = por %p130, %p131
    %p133 = scmp.le.s32.totalorder 1, %s10
    %p134 = scmp.lt.s32.totalorder %s10, 3
    %p135 = pnand %p133, %p134
    %p136 = pneg %p135
    // Predicated region
    $region9: #{basic_conv.1} parent=5 // pred_check
      _
    $region10: #{basic_conv.1} parent=5 // pred_check_branch
      %138 = sbr.rel (%p135) target = $region12
    $region11: #{basic_conv.1} parent=5 // pred_region
      %s139 = ssub.s32 %s10, 1
      // Predicated region
      $region13: #{basic_conv.1} parent=11 // pred_check
        %p140 = pneg %p57
      $region14: #{basic_conv.1} parent=11 // pred_check_branch
        %142 = sbr.rel (%p140) target = $region16
      $region15: #{basic_conv.1} parent=11 // pred_region
        _
      $region16: #{basic_conv.1} parent=11 // pred_fallthru
        _
      // Predicated region
      $region17: #{basic_conv.1} parent=11 // pred_check
        %p143 = pneg %p78
      $region18: #{basic_conv.1} parent=11 // pred_check_branch
        %145 = sbr.rel (%p143) target = $region20
      $region19: #{basic_conv.1} parent=11 // pred_region
        _
      $region20: #{basic_conv.1} parent=11 // pred_fallthru
        _
      // Predicated region
      $region21: #{basic_conv.1} parent=11 // pred_check
        %p146 = pneg %p99
      $region22: #{basic_conv.1} parent=11 // pred_check_branch
        %148 = sbr.rel (%p146) target = $region24
      $region23: #{basic_conv.1} parent=11 // pred_region
        _
      $region24: #{basic_conv.1} parent=11 // pred_fallthru
        _
    $region12: #{basic_conv.1} parent=5 // pred_fallthru
      _
    %p149 = scmp.lt.s32.totalorder %s10, 2
    // Predicated region
    $region25: #{basic_conv.1} parent=5 // pred_check
      %p150 = pneg %p149
    $region26: #{basic_conv.1} parent=5 // pred_check_branch
      %152 = sbr.rel (%p150) target = $region28
    $region27: #{basic_conv.1} parent=5 // pred_region
      // Predicated region
      $region29: #{basic_conv.1} parent=27 // pred_check
        %p153 = pneg %p30
      $region30: #{basic_conv.1} parent=27 // pred_check_branch
        %155 = sbr.rel (%p153) target = $region32
      $region31: #{basic_conv.1} parent=27 // pred_region
        %p156 = scmp.lt.s32.totalorder %s10, 1
        %s157 = scalar_select %p156, %s10, 1
        %s158 = smul.addr %s157, 3
        %s159 = smul.addr %s158, 8
        %s160 = scalar_lea.vmem %s0, %s159
      $region32: #{basic_conv.1} parent=27 // pred_fallthru
        _
    $region28: #{basic_conv.1} parent=5 // pred_fallthru
      _
    %p161 = scmp.le.s32.totalorder 1, %s10
    %p162 = scmp.lt.s32.totalorder %s10, 3
    %p163 = pnand %p161, %p162
    %p164 = pneg %p163
    // Predicated region
    $region33: #{basic_conv.1} parent=5 // pred_check
      _
    $region34: #{basic_conv.1} parent=5 // pred_check_branch
      %166 = sbr.rel (%p163) target = $region36
    $region35: #{basic_conv.1} parent=5 // pred_region
      %s167 = ssub.s32 %s10, 1
      %p168 = scmp.lt.s32.totalorder %s15, 1
      %s169 = scalar_select %p168, %s15, 1
      %s170 = smul.addr %s169, 3
      %s171 = smul.addr %s170, 8
      %s172 = scalar_lea.vmem %s0, %s171
      %p173 = pneg %p36
      %p174 = pneg %p33
      %p175 = pneg %p57
      %p176 = pneg %p54
      %p177 = pneg %p78
      %p178 = pneg %p75
      %p179 = pneg %p99
      %p180 = pneg %p96
      %p181 = pneg %p125
      %p182 = pneg %p122
      %p183 = scmp.lt.s32.totalorder %s15, 1
      %s184 = scalar_select %p183, %s15, 1
      %s185 = smul.addr %s184, 6
      %s186 = smul.addr %s185, 8
      %s187 = scalar_lea.vmem %s4, %s186
      %p188 = scmp.lt.s32.totalorder %s15, 1
      %s189 = scalar_select %p188, %s15, 1
      %s190 = smul.addr %s189, 3
      %s191 = smul.addr %s190, 8
      %s192 = scalar_lea.vmem %s0, %s191
      %p193 = scmp.lt.s32.totalorder %s15, 1
      %s194 = scalar_select %p193, %s15, 1
      %s195 = smul.addr %s194, 6
      %s196 = smul.addr %s195, 8
      %s197 = scalar_lea.vmem %s4, %s196
      %v198 = vld [vmem:[%s192] sm:$0xff]
      %v199 = vld [vmem:[%s192 + $0x8] sm:$0xff]
      %v200 = vld [vmem:[%s192 + $0x10] sm:$0xff]
      %201 = vst [vmem:[#allocation2] sm:$0xff] %v198
      %202 = vst [vmem:[#allocation2 + $0x8] sm:$0xff] %v199
      %vm203 = vcmask 261120
      %204 = vst.msk [vmem:[#allocation2 + $0x10] sm:$0xff] %vm203, %v200
      %v205 = vld [vmem:[%s192] sm:$0xff]
      %v206 = vld [vmem:[%s192 + $0x8] sm:$0xff]
      %v207 = vld [vmem:[%s192 + $0x10] sm:$0xff]
      %211 = vrot.lane.b32.xlu0 %v205, 127
      %v212 = vpop.permute.xlu0 %211
      %213 = vrot.lane.b32.xlu0 %v206, 127
      %v214 = vpop.permute.xlu0 %213
      %215 = vrot.lane.b32.xlu0 %v207, 127
      %v216 = vpop.permute.xlu0 %215
      %vm217 = vcmask 1039360
      %v218 = vsel %vm217, %v212, %v214
      %v219 = vsel %vm217, %v214, %v216
      %223 = vst [vmem:[#allocation2 + $0x18] sm:$0xff] %v218
      %224 = vst [vmem:[#allocation2 + $0x20] sm:$0xff] %v219
      %225 = vst.msk [vmem:[#allocation2 + $0x28] sm:$0xff] %vm203, %v216
      %v226 = vld [vmem:[%s192] sm:$0xff]
      %v227 = vld [vmem:[%s192 + $0x8] sm:$0xff]
      %v228 = vld [vmem:[%s192 + $0x10] sm:$0xff]
      %232 = vrot.lane.b32.xlu0 %v226, 126
      %v233 = vpop.permute.xlu0 %232
      %234 = vrot.lane.b32.xlu0 %v227, 126
      %v235 = vpop.permute.xlu0 %234
      %236 = vrot.lane.b32.xlu0 %v228, 126
      %v237 = vpop.permute.xlu0 %236
      %vm238 = vcmask 1031168
      %v239 = vsel %vm238, %v233, %v235
      %v240 = vsel %vm238, %v235, %v237
      %244 = vst [vmem:[#allocation2 + $0x30] sm:$0xff] %v239
      %245 = vst [vmem:[#allocation2 + $0x38] sm:$0xff] %v240
      %246 = vst.msk [vmem:[#allocation2 + $0x40] sm:$0xff] %vm203, %v237
      %v247 = vld [vmem:[%s192] sm:$0xff]
      %v248 = vld [vmem:[%s192 + $0x8] sm:$0xff]
      %v249 = vld [vmem:[%s192 + $0x10] sm:$0xff]
      %253 = vrot.lane.b32.xlu0 %v247, 110
      %v254 = vpop.permute.xlu0 %253
      %255 = vrot.lane.b32.xlu0 %v248, 110
      %v256 = vpop.permute.xlu0 %255
      %257 = vrot.lane.b32.xlu0 %v249, 110
      %v258 = vpop.permute.xlu0 %257
      %vm259 = vcmask 900096
      %v260 = vsel %vm259, %v254, %v256
      %v261 = vsel %vm259, %v256, %v258
      %265 = vst [vmem:[#allocation2 + $0x48] sm:$0xff] %v260
      %266 = vst [vmem:[#allocation2 + $0x50] sm:$0xff] %v261
      %267 = vst.msk [vmem:[#allocation2 + $0x58] sm:$0xff] %vm203, %v258
      %v268 = vld [vmem:[%s192] sm:$0xff]
      %v269 = vld [vmem:[%s192 + $0x8] sm:$0xff]
      %v270 = vld [vmem:[%s192 + $0x10] sm:$0xff]
      %274 = vrot.lane.b32.xlu0 %v268, 109
      %v275 = vpop.permute.xlu0 %274
      %276 = vrot.lane.b32.xlu0 %v269, 109
      %v277 = vpop.permute.xlu0 %276
      %278 = vrot.lane.b32.xlu0 %v270, 109
      %v279 = vpop.permute.xlu0 %278
      %vm280 = vcmask 891904
      %v281 = vsel %vm280, %v275, %v277
      %v282 = vsel %vm280, %v277, %v279
      %286 = vst [vmem:[#allocation2 + $0x60] sm:$0xff] %v281
      %287 = vst [vmem:[#allocation2 + $0x68] sm:$0xff] %v282
      %288 = vst.msk [vmem:[#allocation2 + $0x70] sm:$0xff] %vm203, %v279
      %v289 = vld [vmem:[%s192] sm:$0xff]
      %v290 = vld [vmem:[%s192 + $0x8] sm:$0xff]
      %v291 = vld [vmem:[%s192 + $0x10] sm:$0xff]
      %295 = vrot.lane.b32.xlu0 %v289, 108
      %v296 = vpop.permute.xlu0 %295
      %297 = vrot.lane.b32.xlu0 %v290, 108
      %v298 = vpop.permute.xlu0 %297
      %299 = vrot.lane.b32.xlu0 %v291, 108
      %v300 = vpop.permute.xlu0 %299
      %vm301 = vcmask 883712
      %v302 = vsel %vm301, %v296, %v298
      %v303 = vsel %vm301, %v298, %v300
      %307 = vst [vmem:[#allocation2 + $0x78] sm:$0xff] %v302
      %308 = vst [vmem:[#allocation2 + $0x80] sm:$0xff] %v303
      %309 = vst.msk [vmem:[#allocation2 + $0x88] sm:$0xff] %vm203, %v300
      %v310 = vld [vmem:[%s192] sm:$0xff]
      %v311 = vld [vmem:[%s192 + $0x8] sm:$0xff]
      %v312 = vld [vmem:[%s192 + $0x10] sm:$0xff]
      %316 = vrot.lane.b32.xlu0 %v310, 92
      %v317 = vpop.permute.xlu0 %316
      %318 = vrot.lane.b32.xlu0 %v311, 92
      %v319 = vpop.permute.xlu0 %318
      %320 = vrot.lane.b32.xlu0 %v312, 92
      %v321 = vpop.permute.xlu0 %320
      %vm322 = vcmask 752640
      %v323 = vsel %vm322, %v317, %v319
      %v324 = vsel %vm322, %v319, %v321
      %328 = vst [vmem:[#allocation2 + $0x90] sm:$0xff] %v323
      %329 = vst [vmem:[#allocation2 + $0x98] sm:$0xff] %v324
      %330 = vst.msk [vmem:[#allocation2 + $0xa0] sm:$0xff] %vm203, %v321
      %v331 = vld [vmem:[%s192] sm:$0xff]
      %v332 = vld [vmem:[%s192 + $0x8] sm:$0xff]
      %v333 = vld [vmem:[%s192 + $0x10] sm:$0xff]
      %337 = vrot.lane.b32.xlu0 %v331, 91
      %v338 = vpop.permute.xlu0 %337
      %339 = vrot.lane.b32.xlu0 %v332, 91
      %v340 = vpop.permute.xlu0 %339
      %341 = vrot.lane.b32.xlu0 %v333, 91
      %v342 = vpop.permute.xlu0 %341
      %vm343 = vcmask 744448
      %v344 = vsel %vm343, %v338, %v340
      %v345 = vsel %vm343, %v340, %v342
      %349 = vst [vmem:[#allocation2 + $0xa8] sm:$0xff] %v344
      %350 = vst [vmem:[#allocation2 + $0xb0] sm:$0xff] %v345
      %351 = vst.msk [vmem:[#allocation2 + $0xb8] sm:$0xff] %vm203, %v342
      %v352 = vld [vmem:[%s192] sm:$0xff]
      %v353 = vld [vmem:[%s192 + $0x8] sm:$0xff]
      %v354 = vld [vmem:[%s192 + $0x10] sm:$0xff]
      %358 = vrot.lane.b32.xlu0 %v352, 90
      %v359 = vpop.permute.xlu0 %358
      %360 = vrot.lane.b32.xlu0 %v353, 90
      %v361 = vpop.permute.xlu0 %360
      %362 = vrot.lane.b32.xlu0 %v354, 90
      %v363 = vpop.permute.xlu0 %362
      %vm364 = vcmask 736256
      %v365 = vsel %vm364, %v359, %v361
      %v366 = vsel %vm364, %v361, %v363
      %370 = vst [vmem:[#allocation2 + $0xc0] sm:$0xff] %v365
      %371 = vst [vmem:[#allocation2 + $0xc8] sm:$0xff] %v366
      %372 = vst.msk [vmem:[#allocation2 + $0xd0] sm:$0xff] %vm203, %v363
      %v373 = vld [vmem:[%s1] sm:$0xff]
      %v374 = vld [vmem:[%s1 + $0x8] sm:$0xff]
      %v375 = vld [vmem:[#allocation2] sm:$0xff]
      %v376 = vld [vmem:[#allocation2 + $0x8] sm:$0xff]
      %v377 = vld [vmem:[#allocation2 + $0x10] sm:$0xff]
      %v378 = vld [vmem:[#allocation2 + $0x18] sm:$0xff]
      %v379 = vld [vmem:[#allocation2 + $0x20] sm:$0xff]
      %v380 = vld [vmem:[#allocation2 + $0x28] sm:$0xff]
      %v381 = vld [vmem:[#allocation2 + $0x30] sm:$0xff]
      %v382 = vld [vmem:[#allocation2 + $0x38] sm:$0xff]
      %v383 = vld [vmem:[#allocation2 + $0x40] sm:$0xff]
      %v384 = vld [vmem:[#allocation2 + $0x48] sm:$0xff]
      %v385 = vld [vmem:[#allocation2 + $0x50] sm:$0xff]
      %v386 = vld [vmem:[#allocation2 + $0x58] sm:$0xff]
      %v387 = vld [vmem:[#allocation2 + $0x60] sm:$0xff]
      %v388 = vld [vmem:[#allocation2 + $0x68] sm:$0xff]
      %v389 = vld [vmem:[#allocation2 + $0x70] sm:$0xff]
      %v390 = vld [vmem:[#allocation2 + $0x78] sm:$0xff]
      %v391 = vld [vmem:[#allocation2 + $0x80] sm:$0xff]
      %v392 = vld [vmem:[#allocation2 + $0x88] sm:$0xff]
      %v393 = vld [vmem:[#allocation2 + $0x90] sm:$0xff]
      %v394 = vld [vmem:[#allocation2 + $0x98] sm:$0xff]
      %v395 = vld [vmem:[#allocation2 + $0xa0] sm:$0xff]
      %v396 = vld [vmem:[#allocation2 + $0xa8] sm:$0xff]
      %v397 = vld [vmem:[#allocation2 + $0xb0] sm:$0xff]
      %v398 = vld [vmem:[#allocation2 + $0xb8] sm:$0xff]
      %v399 = vld [vmem:[#allocation2 + $0xc0] sm:$0xff]
      %v400 = vld [vmem:[#allocation2 + $0xc8] sm:$0xff]
      %v401 = vld [vmem:[#allocation2 + $0xd0] sm:$0xff]
      %vm402 = vcmask 588800
      %v404 = vsel %vm402, %v373, 0
      %v407 = vsel %vm402, %v374, 0
      %409 = vmatprep.subr.mxu0 0.0
      %410 = vmatpush1.msra.mxu0 0.0
      %411 = vmatprep.subr.mxu0 0.0
      %412 = vmatpush1.msra.mxu0 0.0
      %413 = vmatprep.subr.mxu0 0.0
      %414 = vmatpush1.msra.mxu0 0.0
      %415 = vmatprep.subr.mxu0 0.0
      %416 = vmatpush1.msra.mxu0 0.0
      %417 = vmatprep.subr.mxu0 0.0
      %418 = vmatpush1.msra.mxu0 0.0
      %419 = vmatprep.subr.mxu0 0.0
      %420 = vmatpush1.msra.mxu0 0.0
      %421 = vmatprep.subr.mxu0 0.0
      %422 = vmatpush1.msra.mxu0 0.0
      %423 = vmatprep.subr.mxu0 %v400
      %424 = vmatpush1.msra.mxu0 %v399
      %425 = vmatprep.subr.mxu0 %v397
      %426 = vmatpush1.msra.mxu0 %v396
      %427 = vmatprep.subr.mxu0 %v394
      %428 = vmatpush1.msra.mxu0 %v393
      %429 = vmatprep.subr.mxu0 %v391
      %430 = vmatpush1.msra.mxu0 %v390
      %431 = vmatprep.subr.mxu0 %v388
      %432 = vmatpush1.msra.mxu0 %v387
      %433 = vmatprep.subr.mxu0 %v385
      %434 = vmatpush1.msra.mxu0 %v384
      %435 = vmatprep.subr.mxu0 %v382
      %436 = vmatpush1.msra.mxu0 %v381
      %437 = vmatprep.subr.mxu0 %v379
      %438 = vmatpush1.msra.mxu0 %v378
      %439 = vmatprep.subr.mxu0 %v376
      %440 = vmatpush1.msra.mxu0 %v375
      %441 = vmatprep.subr.mxu0 0.0
      %442 = vmatpush2.msra.mxu0 0.0
      %443 = vmatprep.subr.mxu0 0.0
      %444 = vmatpush2.msra.mxu0 0.0
      %445 = vmatprep.subr.mxu0 0.0
      %446 = vmatpush2.msra.mxu0 0.0
      %447 = vmatprep.subr.mxu0 0.0
      %448 = vmatpush2.msra.mxu0 0.0
      %449 = vmatprep.subr.mxu0 0.0
      %450 = vmatpush2.msra.mxu0 0.0
      %451 = vmatprep.subr.mxu0 0.0
      %452 = vmatpush2.msra.mxu0 0.0
      %453 = vmatprep.subr.mxu0 0.0
      %454 = vmatpush2.msra.mxu0 0.0
      %455 = vmatprep.subr.mxu0 0.0
      %456 = vmatpush2.msra.mxu0 0.0
      %457 = vmatprep.subr.mxu0 0.0
      %458 = vmatpush2.msra.mxu0 0.0
      %459 = vmatprep.subr.mxu0 0.0
      %460 = vmatpush2.msra.mxu0 0.0
      %461 = vmatprep.subr.mxu0 0.0
      %462 = vmatpush2.msra.mxu0 0.0
      %463 = vmatprep.subr.mxu0 0.0
      %464 = vmatpush2.msra.mxu0 0.0
      %465 = vmatprep.subr.mxu0 0.0
      %466 = vmatpush2.msra.mxu0 0.0
      %467 = vmatprep.subr.mxu0 0.0
      %468 = vmatpush2.msra.mxu0 0.0
      %469 = vmatprep.subr.mxu0 0.0
      %470 = vmatpush2.msra.mxu0 0.0
      %471 = vmatprep.subr.mxu0 0.0
      %472 = vmatpush2.msra.mxu0 0.0
      %473 = vmatprep.mubr.f32.mxu0 0.0
      %474 = vmatmul.mubr.f32.gmra.mxu0 %v404
      %v475 = vpop.f32.mrf.mxu0
      %v476 = vadd.f32 0.0, %v475
      %v477 = vpop.f32.mrf.mxu0
      %v478 = vadd.f32 0.0, %v477
      %479 = vmatprep.mubr.f32.mxu0 0.0
      %480 = vmatmul.mubr.f32.gmra.mxu0 %v407
      %v481 = vpop.f32.mrf.mxu0
      %v482 = vadd.f32 0.0, %v481
      %v483 = vpop.f32.mrf.mxu0
      %v484 = vadd.f32 0.0, %v483
      %485 = vdwg.mxu0
      %486 = vmatprep.subr.mxu0 0.0
      %487 = vmatpush1.msra.mxu0 0.0
      %488 = vmatprep.subr.mxu0 0.0
      %489 = vmatpush1.msra.mxu0 0.0
      %490 = vmatprep.subr.mxu0 0.0
      %491 = vmatpush1.msra.mxu0 0.0
      %492 = vmatprep.subr.mxu0 0.0
      %493 = vmatpush1.msra.mxu0 0.0
      %494 = vmatprep.subr.mxu0 0.0
      %495 = vmatpush1.msra.mxu0 0.0
      %496 = vmatprep.subr.mxu0 0.0
      %497 = vmatpush1.msra.mxu0 0.0
      %498 = vmatprep.subr.mxu0 0.0
      %499 = vmatpush1.msra.mxu0 0.0
      %500 = vmatprep.subr.mxu0 0.0
      %501 = vmatpush1.msra.mxu0 %v401
      %502 = vmatprep.subr.mxu0 0.0
      %503 = vmatpush1.msra.mxu0 %v398
      %504 = vmatprep.subr.mxu0 0.0
      %505 = vmatpush1.msra.mxu0 %v395
      %506 = vmatprep.subr.mxu0 0.0
      %507 = vmatpush1.msra.mxu0 %v392
      %508 = vmatprep.subr.mxu0 0.0
      %509 = vmatpush1.msra.mxu0 %v389
      %510 = vmatprep.subr.mxu0 0.0
      %511 = vmatpush1.msra.mxu0 %v386
      %512 = vmatprep.subr.mxu0 0.0
      %513 = vmatpush1.msra.mxu0 %v383
      %514 = vmatprep.subr.mxu0 0.0
      %515 = vmatpush1.msra.mxu0 %v380
      %516 = vmatprep.subr.mxu0 0.0
      %517 = vmatpush1.msra.mxu0 %v377
      %518 = vmatprep.subr.mxu0 0.0
      %519 = vmatpush2.msra.mxu0 0.0
      %520 = vmatprep.subr.mxu0 0.0
      %521 = vmatpush2.msra.mxu0 0.0
      %522 = vmatprep.subr.mxu0 0.0
      %523 = vmatpush2.msra.mxu0 0.0
      %524 = vmatprep.subr.mxu0 0.0
      %525 = vmatpush2.msra.mxu0 0.0
      %526 = vmatprep.subr.mxu0 0.0
      %527 = vmatpush2.msra.mxu0 0.0
      %528 = vmatprep.subr.mxu0 0.0
      %529 = vmatpush2.msra.mxu0 0.0
      %530 = vmatprep.subr.mxu0 0.0
      %531 = vmatpush2.msra.mxu0 0.0
      %532 = vmatprep.subr.mxu0 0.0
      %533 = vmatpush2.msra.mxu0 0.0
      %534 = vmatprep.subr.mxu0 0.0
      %535 = vmatpush2.msra.mxu0 0.0
      %536 = vmatprep.subr.mxu0 0.0
      %537 = vmatpush2.msra.mxu0 0.0
      %538 = vmatprep.subr.mxu0 0.0
      %539 = vmatpush2.msra.mxu0 0.0
      %540 = vmatprep.subr.mxu0 0.0
      %541 = vmatpush2.msra.mxu0 0.0
      %542 = vmatprep.subr.mxu0 0.0
      %543 = vmatpush2.msra.mxu0 0.0
      %544 = vmatprep.subr.mxu0 0.0
      %545 = vmatpush2.msra.mxu0 0.0
      %546 = vmatprep.subr.mxu0 0.0
      %547 = vmatpush2.msra.mxu0 0.0
      %548 = vmatprep.subr.mxu0 0.0
      %549 = vmatpush2.msra.mxu0 0.0
      %550 = vmatprep.mubr.f32.mxu0 0.0
      %551 = vmatmul.mubr.f32.gmra.mxu0 %v404
      %v552 = vpop.f32.mrf.mxu0
      %v553 = vadd.f32 0.0, %v552
      %v554 = vpop.f32.mrf.mxu0
      %555 = vmatprep.mubr.f32.mxu0 0.0
      %556 = vmatmul.mubr.f32.gmra.mxu0 %v407
      %v557 = vpop.f32.mrf.mxu0
      %v558 = vadd.f32 0.0, %v557
      %v559 = vpop.f32.mrf.mxu0
      %560 = vdwg.mxu0
      %v561 = vld [vmem:[%s2] sm:$0xff]
      %v562 = vld [vmem:[%s2 + $0x8] sm:$0xff]
      %564 = vset.pattern.permute.xlu0 0
      %565 = vperm.xlu0 %564, %v561
      %v566 = vpop.permute.xlu0 %565
      %569 = vset.pattern.permute.xlu0 0
      %570 = vperm.xlu0 %569, %v562
      %v571 = vpop.permute.xlu0 %570
      %v573 = vmul.f32 %v476, %v566
      %v574 = vmul.f32 %v478, %v566
      %v575 = vmul.f32 %v553, %v566
      %v576 = vmul.f32 %v482, %v571
      %v577 = vmul.f32 %v484, %v571
      %v578 = vmul.f32 %v558, %v571
      %v579 = vld [vmem:[%s3] sm:$0xff]
      %v580 = vld [vmem:[%s3 + $0x8] sm:$0xff]
      %582 = vset.pattern.permute.xlu0 0
      %583 = vperm.xlu0 %582, %v579
      %v584 = vpop.permute.xlu0 %583
      %587 = vset.pattern.permute.xlu0 0
      %588 = vperm.xlu0 %587, %v580
      %v589 = vpop.permute.xlu0 %588
      %v591 = vadd.f32 %v573, %v584
      %v592 = vadd.f32 %v574, %v584
      %v593 = vadd.f32 %v575, %v584
      %v594 = vadd.f32 %v576, %v589
      %v595 = vadd.f32 %v577, %v589
      %v596 = vadd.f32 %v578, %v589
      %v597 = vmax.f32 %v591, 0.0
      %v598 = vmax.f32 %v592, 0.0
      %v599 = vmax.f32 %v593, 0.0
      %v600 = vmax.f32 %v594, 0.0
      %v601 = vmax.f32 %v595, 0.0
      %v602 = vmax.f32 %v596, 0.0
      %603 = vst [vmem:[%s197] sm:$0xff] %v597
      %604 = vst [vmem:[%s197 + $0x8] sm:$0xff] %v598
      %605 = vst.msk [vmem:[%s197 + $0x10] sm:$0xff] %vm203, %v599
      %606 = vst [vmem:[%s197 + $0x18] sm:$0xff] %v600
      %607 = vst [vmem:[%s197 + $0x20] sm:$0xff] %v601
      %608 = vst.msk [vmem:[%s197 + $0x28] sm:$0xff] %vm203, %v602
      %p609 = scmp.lt.s32.totalorder %s15, 1
      %s610 = scalar_select %p609, %s15, 1
      %s611 = smul.addr %s610, 6
      %s612 = smul.addr %s611, 8
      %s613 = scalar_lea.vmem %s4, %s612
      // Predicated region
      $region37: #{basic_conv.1} parent=35 // pred_check
        %p614 = pneg %p122
      $region38: #{basic_conv.1} parent=35 // pred_check_branch
        %616 = sbr.rel (%p614) target = $region40
      $region39: #{basic_conv.1} parent=35 // pred_region
        _
      $region40: #{basic_conv.1} parent=35 // pred_fallthru
        _
    $region36: #{basic_conv.1} parent=5 // pred_fallthru
      _
    %p617 = scmp.le.s32.totalorder 2, %s10
    // Predicated region
    $region41: #{basic_conv.1} parent=5 // pred_check
      %p618 = pneg %p617
    $region42: #{basic_conv.1} parent=5 // pred_check_branch
      %620 = sbr.rel (%p618) target = $region44
    $region43: #{basic_conv.1} parent=5 // pred_region
      %s621 = ssub.s32 %s10, 2
      // Predicated region
      $region45: #{basic_conv.1} parent=43 // pred_check
        %p622 = pneg %p128
      $region46: #{basic_conv.1} parent=43 // pred_check_branch
        %624 = sbr.rel (%p622) target = $region48
      $region47: #{basic_conv.1} parent=43 // pred_region
        %p625 = scmp.lt.s32.totalorder %s16, 1
        %s626 = scalar_select %p625, %s16, 1
        %s627 = smul.addr %s626, 6
        %s628 = smul.addr %s627, 8
        %s629 = scalar_lea.vmem %s4, %s628
      $region48: #{basic_conv.1} parent=43 // pred_fallthru
        _
    $region44: #{basic_conv.1} parent=5 // pred_fallthru
      _
  $region6: #{basic_conv.1} parent=0 // loop_footer
    %s14 = sadd.s32 1, %s10
  $region7: #{basic_conv.1} parent=0 // loop_footer_branch
    %9 = sbr.rel target = $region3
  $region8: #{basic_conv.1} parent=0 // loop_exit
    _

</llo_original>
